<compile_context>
chip_gen: v5e
topology: v5e:2x2
jax: 0.10.0
libtpu: 0.0.40
codegen_flags: <defaults>
</compile_context>

<pallas_src>
from functools import partial

import jax
import jax.numpy as jnp
from jax.experimental import pallas as pl
from jax.experimental.pallas import tpu as pltpu


# Set to jnp.bfloat16 on v6e/v7x for ~2x MXU throughput (gating/BN stay f32).
MXU_DTYPE = jnp.float32


def _round_up(x, m):
    return ((x + m - 1) // m) * m


def _mxu_dot(a, b):
    return jnp.dot(a.astype(MXU_DTYPE), b.astype(MXU_DTYPE),
                   preferred_element_type=jnp.float32)


# ----------------------------------------------------------------------------
# Tiled Linear (+ optional ReLU): weights resident, rows pipelined
# ----------------------------------------------------------------------------
def _linear_kernel(x_ref, w_ref, b_ref, o_ref, *, act):
    y = _mxu_dot(x_ref[...], w_ref[...]) + b_ref[...]
    if act == "relu":
        y = jnp.maximum(y, 0.0)
    o_ref[...] = y


def linear_tiled(x, w, b, *, act="none", block_rows):
    rows, cin = x.shape
    cout = w.shape[1]
    num_r = rows // block_rows
    return pl.pallas_call(
        partial(_linear_kernel, act=act),
        out_shape=jax.ShapeDtypeStruct((rows, cout), jnp.float32),
        grid=(num_r,),
        in_specs=[
            pl.BlockSpec((block_rows, cin), lambda r: (r, 0)),
            pl.BlockSpec((cin, cout), lambda r: (0, 0)),   # resident weight
            pl.BlockSpec((1, cout), lambda r: (0, 0)),     # resident bias
        ],
        out_specs=pl.BlockSpec((block_rows, cout), lambda r: (r, 0)),
        compiler_params=pltpu.CompilerParams(
            dimension_semantics=("parallel",),
            vmem_limit_bytes=48 * 1024 * 1024,
        ),
    )(x, w, b)


# ----------------------------------------------------------------------------
# Fused CGConv (gating + scatter-mean + residual) + folded BatchNorm (eval)
# grid = (node blocks [parallel], edge blocks [arbitrary]); block-sparse skip
# via scalar-prefetched per-edge-block node-block ranges (edges sorted by dst).
# ----------------------------------------------------------------------------
def _conv_bn_kernel(rng_ref, dstr_ref, dstc_ref, pi_ref, pj_ref, ea_ref, we_ref,
                    bias_ref, x_ref, invdeg_ref, scale_ref, shift_ref,
                    o_ref, acc_ref, *, BN, BM, C, num_k):
    i = pl.program_id(0)
    k = pl.program_id(1)

    @pl.when(k == 0)
    def _init():
        acc_ref[...] = jnp.zeros_like(acc_ref)

    lo = rng_ref[0, k]
    hi = rng_ref[1, k]

    @pl.when(jnp.logical_and(i >= lo, i <= hi))
    def _accumulate():
        base = i * BN
        # block-local one-hots built in-register from i32 dst indices
        iota_mn = jax.lax.broadcasted_iota(jnp.int32, (BM, BN), 1) + base
        oh_gather = (dstc_ref[...] == iota_mn).astype(jnp.float32)     # [BM, BN]
        iota_nm = jax.lax.broadcasted_iota(jnp.int32, (BN, BM), 0) + base
        oh_scatter = (dstr_ref[...] == iota_nm).astype(jnp.float32)    # [BN, BM]

        # dst-role node projection gathered from the VMEM-resident node block
        pi_g = _mxu_dot(oh_gather, pi_ref[...])                        # [BM, 2C]
        # tiny edge-feature projection, kept in-kernel (no HBM intermediate)
        e_proj = _mxu_dot(ea_ref[...], we_ref[...])                    # [BM, 2C]
        pre = pi_g + pj_ref[...] + e_proj + bias_ref[...]              # [BM, 2C]

        f = pre[:, :C]
        s = pre[:, C:]
        gate = pl.reciprocal(1.0 + jnp.exp(-f), approx=True)           # sigmoid (EUP)
        soft = jnp.maximum(s, 0.0) + jnp.log(1.0 + jnp.exp(-jnp.abs(s)))  # softplus
        msg = gate * soft                                              # [BM, C]

        acc_ref[...] += _mxu_dot(oh_scatter, msg)                      # scatter-sum

    @pl.when(k == num_k - 1)
    def _finalize():
        h = x_ref[...] + acc_ref[...] * invdeg_ref[...]                # residual + mean
        o_ref[...] = h * scale_ref[...] + shift_ref[...]               # folded BN (eval)


def conv_bn_layer(ranges, dst_row, dst_col, p_node, pj_gathered, ea, x, inv_deg,
                  layer, *, BN, BM, C, E):
    n_pad = x.shape[0]
    m_pad = ea.shape[0]
    num_i = n_pad // BN
    num_k = m_pad // BM
    kernel = partial(_conv_bn_kernel, BN=BN, BM=BM, C=C, num_k=num_k)
    grid_spec = pltpu.PrefetchScalarGridSpec(
        num_scalar_prefetch=1,
        grid=(num_i, num_k),
        in_specs=[
            pl.BlockSpec((1, BM), lambda i, k, rng: (0, k)),        # dst (lane layout)
            pl.BlockSpec((BM, 1), lambda i, k, rng: (k, 0)),        # dst (sublane layout)
            pl.BlockSpec((BN, 2 * C), lambda i, k, rng: (i, 0)),    # node proj (dst-role)
            pl.BlockSpec((BM, 2 * C), lambda i, k, rng: (k, 0)),    # gathered src-role proj
            pl.BlockSpec((BM, E), lambda i, k, rng: (k, 0)),        # edge features
            pl.BlockSpec((E, 2 * C), lambda i, k, rng: (0, 0)),     # W_edge (resident)
            pl.BlockSpec((1, 2 * C), lambda i, k, rng: (0, 0)),     # [bf|bs] (resident)
            pl.BlockSpec((BN, C), lambda i, k, rng: (i, 0)),        # x (residual)
            pl.BlockSpec((BN, 1), lambda i, k, rng: (i, 0)),        # 1/deg
            pl.BlockSpec((1, C), lambda i, k, rng: (0, 0)),         # BN scale (resident)
            pl.BlockSpec((1, C), lambda i, k, rng: (0, 0)),         # BN shift (resident)
        ],
        out_specs=pl.BlockSpec((BN, C), lambda i, k, rng: (i, 0)),
        scratch_shapes=[pltpu.VMEM((BN, C), jnp.float32)],
    )
    return pl.pallas_call(
        kernel,
        out_shape=jax.ShapeDtypeStruct((n_pad, C), jnp.float32),
        grid_spec=grid_spec,
        compiler_params=pltpu.CompilerParams(
            dimension_semantics=("parallel", "arbitrary"),
            vmem_limit_bytes=48 * 1024 * 1024,
        ),
    )(ranges, dst_row, dst_col, p_node, pj_gathered, ea,
      layer["w_edge"], layer["b_fs"], x, inv_deg,
      layer["bn_scale"], layer["bn_shift"])


# ----------------------------------------------------------------------------
# Fused tail: global_mean_pool + post_fc(+ReLU) + lin_out in one kernel
# ----------------------------------------------------------------------------
def _tail_kernel(batch_ref, nodes_ref, invc_ref, wp_ref, bp_ref, wo_ref, bo_ref,
                 y_ref, acc_ref, *, G_pad, BN, num_k):
    k = pl.program_id(0)

    @pl.when(k == 0)
    def _init():
        acc_ref[...] = jnp.zeros_like(acc_ref)

    gio = jax.lax.broadcasted_iota(jnp.int32, (G_pad, BN), 0)
    oh = (batch_ref[...] == gio).astype(jnp.float32)                # [G_pad, BN]
    acc_ref[...] += _mxu_dot(oh, nodes_ref[...])                    # pool-sum

    @pl.when(k == num_k - 1)
    def _finalize():
        pooled = acc_ref[...] * invc_ref[...]                       # mean pool
        h = jnp.maximum(_mxu_dot(pooled, wp_ref[...]) + bp_ref[...], 0.0)
        y_ref[...] = _mxu_dot(h, wo_ref[...]) + bo_ref[...]


def tail_head(batch_p, nodes, inv_cnt, params, *, BN, G_pad):
    n_pad, C = nodes.shape
    num_k = n_pad // BN
    D2 = params["D2"]
    OUTP = params["OUTP"]
    kernel = partial(_tail_kernel, G_pad=G_pad, BN=BN, num_k=num_k)
    return pl.pallas_call(
        kernel,
        out_shape=jax.ShapeDtypeStruct((G_pad, OUTP), jnp.float32),
        grid=(num_k,),
        in_specs=[
            pl.BlockSpec((1, BN), lambda k: (0, k)),         # batch ids
            pl.BlockSpec((BN, C), lambda k: (k, 0)),         # node features
            pl.BlockSpec((G_pad, 1), lambda k: (0, 0)),      # 1/count (resident)
            pl.BlockSpec((C, D2), lambda k: (0, 0)),         # post_fc W (resident)
            pl.BlockSpec((1, D2), lambda k: (0, 0)),
            pl.BlockSpec((D2, OUTP), lambda k: (0, 0)),      # lin_out W (resident)
            pl.BlockSpec((1, OUTP), lambda k: (0, 0)),
        ],
        out_specs=pl.BlockSpec((G_pad, OUTP), lambda k: (0, 0)),
        scratch_shapes=[pltpu.VMEM((G_pad, C), jnp.float32)],
        compiler_params=pltpu.CompilerParams(
            dimension_semantics=("arbitrary",),
            vmem_limit_bytes=48 * 1024 * 1024,
        ),
    )(batch_p, nodes, inv_cnt, params["post_w"], params["post_b"],
      params["out_w"], params["out_b"])


# ----------------------------------------------------------------------------
# CGCNN forward
# ----------------------------------------------------------------------------
def cgcnn_forward(x, edge_src, edge_dst, edge_attr, batch, params, num_graphs):
    N, F = x.shape
    M, E = edge_attr.shape
    C = params["C"]

    # ---- tiling choices ----------------------------------------------------
    BN = 128 if _round_up(N, 8) >= 128 else _round_up(N, 8)
    N_pad = _round_up(N, BN)
    BM = 512 if _round_up(M, 128) >= 512 else _round_up(M, 128)
    M_pad = _round_up(M, BM)
    num_k = M_pad // BM
    G_pad = _round_up(max(num_graphs, 1), 8)

    # ---- glue: pad node features -------------------------------------------
    x_p = jnp.zeros((N_pad, F), jnp.float32).at[:N, :].set(x)

    # ---- glue: sort edges by destination (CSR-style) and pad ---------------
    order = jnp.argsort(edge_dst)
    dst_s = edge_dst[order].astype(jnp.int32)
    src_s = edge_src[order].astype(jnp.int32)
    ea_s = edge_attr[order]
    pad_m = M_pad - M
    dst_p = jnp.concatenate([dst_s, jnp.full((pad_m,), N_pad, jnp.int32)])
    src_p = jnp.concatenate([src_s, jnp.zeros((pad_m,), jnp.int32)])
    ea_p = jnp.concatenate([ea_s, jnp.zeros((pad_m, E), jnp.float32)], axis=0)
    dst_row = dst_p.reshape(1, M_pad)
    dst_col = dst_p.reshape(M_pad, 1)

    # per-edge-block node-block ranges -> SMEM scalar prefetch (block sparsity)
    eblk = (dst_p // BN).reshape(num_k, BM)
    ranges = jnp.stack([eblk.min(axis=1), eblk.max(axis=1)]).astype(jnp.int32)

    # in-degree for mean aggregation (clamped like PyG scatter-mean)
    deg = jnp.zeros((N,), jnp.float32).at[edge_dst].add(1.0)
    inv_deg = jnp.concatenate(
        [1.0 / jnp.maximum(deg, 1.0), jnp.ones((N_pad - N,), jnp.float32)]
    ).reshape(N_pad, 1)

    # pooling helpers
    batch_p = jnp.concatenate(
        [batch.astype(jnp.int32), jnp.full((N_pad - N,), G_pad, jnp.int32)]
    ).reshape(1, N_pad)
    cnt = jnp.zeros((num_graphs,), jnp.float32).at[batch].add(1.0)
    inv_cnt = jnp.concatenate(
        [1.0 / jnp.maximum(cnt, 1.0), jnp.ones((G_pad - num_graphs,), jnp.float32)]
    ).reshape(G_pad, 1)

    # ---- pre_fc (Linear + ReLU) ---------------------------------------------
    out = linear_tiled(x_p, params["pre_w"], params["pre_b"], act="relu",
                       block_rows=BN)

    # ---- GC layers: CGConv + folded BatchNorm -------------------------------
    zeros_bias = jnp.zeros((1, 4 * C), jnp.float32)
    for layer in params["convs"]:
        # fused node projection: [x@Wf_i | x@Ws_i | x@Wf_j | x@Ws_j]  -> [N,4C]
        p_node = linear_tiled(out, layer["w_node"], zeros_bias, act="none",
                              block_rows=BN)
        # per-edge gather of the source-role half (XLA gather glue)
        # TODO(synk): could be moved in-kernel with a DMA/row gather to skip
        #             the [M, 2C] HBM intermediate.
        pj_gathered = jnp.take(p_node, src_p, axis=0)[:, 2 * C:]
        out = conv_bn_layer(ranges, dst_row, dst_col, p_node, pj_gathered, ea_p,
                            out, inv_deg, layer, BN=BN, BM=BM, C=C, E=E)
        # TODO(synk): F.dropout(p=0.2) is identity in eval mode; not emitted.

    # ---- fused tail: global_mean_pool + post_fc + lin_out -------------------
    y_pad = tail_head(batch_p, out, inv_cnt, params, BN=BN, G_pad=G_pad)
    return y_pad[:num_graphs, :params["output_dim"]]


# ----------------------------------------------------------------------------
# Deterministic parameter construction (lane-padded + BN folded)
# ----------------------------------------------------------------------------
def make_params(key, num_features, num_edge_features, dim1, dim2, output_dim,
                gc_count=3):
    C = _round_up(dim1, 128)
    D2 = _round_up(dim2, 128)
    OUTP = _round_up(output_dim, 128)
    E = num_edge_features
    eps = 1e-5
    scale = 0.1
    ks = jax.random.split(key, 3 + 7 * gc_count)

    def w(k, shape):
        return scale * jax.random.normal(k, shape, jnp.float32)

    def pad2(a, r, c):
        return jnp.zeros((r, c), jnp.float32).at[:a.shape[0], :a.shape[1]].set(a)

    params = {
        "C": C, "D2": D2, "OUTP": OUTP,
        "dim1": dim1, "dim2": dim2, "output_dim": output_dim,
        "pre_w": pad2(w(ks[0], (num_features, dim1)), num_features, C),
        "pre_b": jnp.zeros((1, C), jnp.float32),
        "post_w": pad2(w(ks[1], (dim1, dim2)), C, D2),
        "post_b": jnp.zeros((1, D2), jnp.float32),
        "out_w": pad2(w(ks[2], (dim2, output_dim)), D2, OUTP),
        "out_b": jnp.zeros((1, OUTP), jnp.float32),
        "convs": [],
    }

    kk = 3
    for _ in range(gc_count):
        wf_i = w(ks[kk + 0], (dim1, dim1))
        ws_i = w(ks[kk + 1], (dim1, dim1))
        wf_j = w(ks[kk + 2], (dim1, dim1))
        ws_j = w(ks[kk + 3], (dim1, dim1))
        wf_e = w(ks[kk + 4], (E, dim1))
        ws_e = w(ks[kk + 5], (E, dim1))
        gkey = ks[kk + 6]
        kk += 7

        # fused node weight [C, 4C]: cols [0:2C)=dst-role [Wf_i|Ws_i],
        # cols [2C:4C)=src-role [Wf_j|Ws_j]; padded rows/cols are zero.
        w_node = jnp.zeros((C, 4 * C), jnp.float32)
        w_node = w_node.at[:dim1, 0:dim1].set(wf_i)
        w_node = w_node.at[:dim1, C:C + dim1].set(ws_i)
        w_node = w_node.at[:dim1, 2 * C:2 * C + dim1].set(wf_j)
        w_node = w_node.at[:dim1, 3 * C:3 * C + dim1].set(ws_j)

        w_edge = jnp.zeros((E, 2 * C), jnp.float32)
        w_edge = w_edge.at[:, 0:dim1].set(wf_e)
        w_edge = w_edge.at[:, C:C + dim1].set(ws_e)

        b_fs = jnp.zeros((1, 2 * C), jnp.float32)   # [bf | bs]

        # BatchNorm (eval, running stats) folded into scale/shift.
        g1, g2, g3, g4 = jax.random.split(gkey, 4)
        gamma = 1.0 + 0.1 * jax.random.normal(g1, (dim1,), jnp.float32)
        beta = 0.1 * jax.random.normal(g2, (dim1,), jnp.float32)
        rmean = 0.1 * jax.random.normal(g3, (dim1,), jnp.float32)
        rvar = 1.0 + 0.1 * jnp.abs(jax.random.normal(g4, (dim1,), jnp.float32))
        s = gamma / jnp.sqrt(rvar + eps)
        sh = beta - rmean * s
        bn_scale = jnp.zeros((1, C), jnp.float32).at[0, :dim1].set(s)
        bn_shift = jnp.zeros((1, C), jnp.float32).at[0, :dim1].set(sh)

        params["convs"].append(dict(w_node=w_node, w_edge=w_edge, b_fs=b_fs,
                                    bn_scale=bn_scale, bn_shift=bn_shift))
    return params


# ----------------------------------------------------------------------------
# Pure-JAX reference (dense, unpadded) for a sanity check
# ----------------------------------------------------------------------------
def cgcnn_reference(x, edge_src, edge_dst, edge_attr, batch, params, num_graphs):
    dim1, dim2, od = params["dim1"], params["dim2"], params["output_dim"]
    C = params["C"]
    N = x.shape[0]
    out = jnp.maximum(x @ params["pre_w"][:x.shape[1], :dim1]
                      + params["pre_b"][0, :dim1], 0.0)
    for layer in params["convs"]:
        wf_i = layer["w_node"][:dim1, 0:dim1]
        ws_i = layer["w_node"][:dim1, C:C + dim1]
        wf_j = layer["w_node"][:dim1, 2 * C:2 * C + dim1]
        ws_j = layer["w_node"][:dim1, 3 * C:3 * C + dim1]
        wf_e = layer["w_edge"][:, 0:dim1]
        ws_e = layer["w_edge"][:, C:C + dim1]
        bf = layer["b_fs"][0, :dim1]
        bs = layer["b_fs"][0, C:C + dim1]
        x_i = out[edge_dst]
        x_j = out[edge_src]
        f = x_i @ wf_i + x_j @ wf_j + edge_attr @ wf_e + bf
        s = x_i @ ws_i + x_j @ ws_j + edge_attr @ ws_e + bs
        msg = jax.nn.sigmoid(f) * jax.nn.softplus(s)
        agg = jnp.zeros((N, dim1), jnp.float32).at[edge_dst].add(msg)
        deg = jnp.zeros((N,), jnp.float32).at[edge_dst].add(1.0)
        h = out + agg / jnp.maximum(deg, 1.0)[:, None]
        out = h * layer["bn_scale"][0, :dim1] + layer["bn_shift"][0, :dim1]
    pooled = jnp.zeros((num_graphs, dim1), jnp.float32).at[batch].add(out)
    cnt = jnp.zeros((num_graphs,), jnp.float32).at[batch].add(1.0)
    pooled = pooled / jnp.maximum(cnt, 1.0)[:, None]
    h = jnp.maximum(pooled @ params["post_w"][:dim1, :dim2]
                    + params["post_b"][0, :dim2], 0.0)
    return h @ params["out_w"][:dim2, :od] + params["out_b"][0, :od]


# ----------------------------------------------------------------------------
if __name__ == "__main__":
    key = jax.random.PRNGKey(0)
    k_x, k_e, k_s, k_d, k_p = jax.random.split(key, 5)

    # small synthetic graph batch (2 graphs)
    N, M = 16, 32                 # nodes, edges
    num_features = 8
    num_edge_features = 4
    dim1 = dim2 = 64              # module defaults; padded to 128 lanes inside
    output_dim = 1
    num_graphs = 2

    x = jax.random.normal(k_x, (N, num_features), jnp.float32)
    edge_attr = jax.random.normal(k_e, (M, num_edge_features), jnp.float32)
    edge_src = jax.random.randint(k_s, (M,), 0, N)
    edge_dst = jax.random.randint(k_d, (M,), 0, N)
    batch = jnp.concatenate(
        [jnp.zeros(N // 2, jnp.int32), jnp.ones(N - N // 2, jnp.int32)]
    )

    params = make_params(
        k_p, num_features, num_edge_features, dim1, dim2, output_dim, gc_count=3
    )

    out = cgcnn_forward(x, edge_src, edge_dst, edge_attr, batch, params, num_graphs)
    out = jax.block_until_ready(out)
    assert out.shape == (num_graphs, output_dim)

    ref = cgcnn_reference(x, edge_src, edge_dst, edge_attr, batch, params, num_graphs)
    err = float(jnp.max(jnp.abs(out - ref)))
    assert err < 5e-2, f"kernel vs reference mismatch: {err}"
    print("KERNEL_OK")
</pallas_src>

<mosaic_0001>
module attributes {stable_mosaic.version = 11 : i64} {
  func.func @_linear_kernel(%arg0: i32, %arg1: memref<16x8xf32, #tpu.memory_space<vmem>>, %arg2: memref<8x128xf32, #tpu.memory_space<vmem>>, %arg3: memref<1x128xf32, #tpu.memory_space<vmem>>, %arg4: memref<16x128xf32, #tpu.memory_space<vmem>>) attributes {dimension_semantics = [#tpu.dimension_semantics<parallel>], iteration_bounds = array<i64: 1>, scalar_prefetch = 0 : i64, scratch_operands = 0 : i64, tpu.core_type = #tpu.core_type<tc>, window_params = [{transform_indices = @transform_0, window_bounds = array<i64: 16, 8>}, {pipeline_mode = #tpu.pipeline_mode<synchronous>, transform_indices = @transform_1, window_bounds = array<i64: 8, 128>}, {pipeline_mode = #tpu.pipeline_mode<synchronous>, transform_indices = @transform_2, window_bounds = array<i64: 1, 128>}, {transform_indices = @transform_3, window_bounds = array<i64: 16, 128>}]} {
    %c0 = arith.constant 0 : index
    %c0_0 = arith.constant 0 : index
    %0 = vector.load %arg1[%c0, %c0_0] : memref<16x8xf32, #tpu.memory_space<vmem>>, vector<16x8xf32>
    %c0_1 = arith.constant 0 : index
    %c0_2 = arith.constant 0 : index
    %1 = vector.load %arg2[%c0_1, %c0_2] : memref<8x128xf32, #tpu.memory_space<vmem>>, vector<8x128xf32>
    %cst = arith.constant dense<0.000000e+00> : vector<16x128xf32>
    %2 = tpu.matmul %0, %1, %cst {dimension_numbers = #tpu.dot_dimension_numbers<[1], [0], [0], [1], [0, 0, 1, 1], [], []>} : vector<16x8xf32>, vector<8x128xf32>, vector<16x128xf32> -> vector<16x128xf32>
    %c0_3 = arith.constant 0 : index
    %c0_4 = arith.constant 0 : index
    %3 = vector.load %arg3[%c0_3, %c0_4] : memref<1x128xf32, #tpu.memory_space<vmem>>, vector<1x128xf32>
    %4 = vector.broadcast %3 : vector<1x128xf32> to vector<16x128xf32>
    %5 = arith.addf %2, %4 : vector<16x128xf32>
    %cst_5 = arith.constant 0.000000e+00 : f32
    %6 = vector.broadcast %cst_5 : f32 to vector<16x128xf32>
    %7 = arith.maximumf %5, %6 : vector<16x128xf32>
    %c0_6 = arith.constant 0 : index
    %c0_7 = arith.constant 0 : index
    %8 = vector.load %arg4[%c0_6, %c0_7] : memref<16x128xf32, #tpu.memory_space<vmem>>, vector<16x128xf32>
    tpu.vector_store %arg4[%c0_6, %c0_7], %7 {strides = array<i32>} : memref<16x128xf32, #tpu.memory_space<vmem>>, vector<16x128xf32>,
    return
  }
  func.func @transform_0(%arg0: i32) -> (i32, i32) {
    %c0_i32 = arith.constant 0 : i32
    %c0_i32_0 = arith.constant 0 : i32
    return %arg0, %c0_i32 : i32, i32
  }
  func.func @transform_1(%arg0: i32) -> (i32, i32) {
    %c0_i32 = arith.constant 0 : i32
    %c0_i32_0 = arith.constant 0 : i32
    %c0_i32_1 = arith.constant 0 : i32
    return %c0_i32, %c0_i32_0 : i32, i32
  }
  func.func @transform_2(%arg0: i32) -> (i32, i32) {
    %c0_i32 = arith.constant 0 : i32
    %c0_i32_0 = arith.constant 0 : i32
    %c0_i32_1 = arith.constant 0 : i32
    return %c0_i32, %c0_i32_0 : i32, i32
  }
  func.func @transform_3(%arg0: i32) -> (i32, i32) {
    %c0_i32 = arith.constant 0 : i32
    %c0_i32_0 = arith.constant 0 : i32
    return %arg0, %c0_i32 : i32, i32
  }
}

</mosaic_0001>

<llo_original>
// kernel: tpu_custom_call.1
$region0: #{tpu_custom_call.1}
  #allocation0 [shape = 'u32[]', space=smem, size = 0x4, offset = 0x4, fixed_abs, tag = 'smem constant byte address 0x4 - core index']
  #allocation1 [shape = 'u32[72,128]{1,0:T(1,128)}', space=vmem, size = 0x9000, scoped, tag = 'internal scratch']
  %s0 = inlined_call_operand.vmem [shape: f32[16,8], index: 0, kind: input, shape index: {}]
  %s1 = inlined_call_operand.vmem [shape: f32[8,128], index: 1, kind: input, shape index: {}]
  %s2 = inlined_call_operand.vmem [shape: f32[1,128], index: 2, kind: input, shape index: {}]
  %s3 = inlined_call_operand.hbm [shape: f32[16,128], index: 3, kind: output, shape index: {}]
  %s4 = sld [smem:[#allocation0]]
  $region22: #{tpu_custom_call.1} parent=0
    _
  %s6 = ssub.s32 1, %s4
  %s7 = scalar_select 0, %s6, %s4
  $region1: #{tpu_custom_call.1} parent=0
    #allocation2 [shape = 'u8[8192]{0}', space=vmem, size = 0x2000, scoped, tag = 'output window, operand 0, single buffered']
    #allocation3 [shape = 's32[1]{0}', space=sflag, size = 0x4, scoped, tag = 'scoped memory for tpu_custom_call.1']
    %8 = vsyncpa [#allocation3], 0
    // Predicated region
    $region2: #{tpu_custom_call.1} parent=1 // pred_check
      _
    $region3: #{tpu_custom_call.1} parent=1 // pred_check_branch
      %10 = sbr.rel (0) target = $region5
    $region4: #{tpu_custom_call.1} parent=1 // pred_region
      _
    $region5: #{tpu_custom_call.1} parent=1 // pred_fallthru
      _
    // Predicated region
    $region6: #{tpu_custom_call.1} parent=1 // pred_check
      _
    $region7: #{tpu_custom_call.1} parent=1 // pred_check_branch
      %12 = sbr.rel (0) target = $region9
    $region8: #{tpu_custom_call.1} parent=1 // pred_region
      _
    $region9: #{tpu_custom_call.1} parent=1 // pred_fallthru
      _
    // Predicated region
    $region10: #{tpu_custom_call.1} parent=1 // pred_check
      _
    $region11: #{tpu_custom_call.1} parent=1 // pred_check_branch
      %14 = sbr.rel (0) target = $region13
    $region12: #{tpu_custom_call.1} parent=1 // pred_region
      _
    $region13: #{tpu_custom_call.1} parent=1 // pred_fallthru
      _
    %v15 = vld [vmem:[%s0] sm:$0xff]
    %v16 = vld [vmem:[%s0 + $0x8] sm:$0xff]
    %v17 = vld [vmem:[%s1] sm:$0xff]
    %v18 = vld [vmem:[%s2] sm:$0x1]
    %v20 = vperm.slane %v18, 0
    %vm22 = vcmask 64512
    %v24 = vsel %vm22, %v15, 0
    %v27 = vsel %vm22, %v16, 0
    %29 = vmatpush.msra.mxu0 0.0
    %30 = vmatpush.msra.mxu0 0.0
    %31 = vmatpush.msra.mxu0 0.0
    %32 = vmatpush.msra.mxu0 0.0
    %33 = vmatpush.msra.mxu0 0.0
    %34 = vmatpush.msra.mxu0 0.0
    %35 = vmatpush.msra.mxu0 0.0
    %36 = vmatpush.msra.mxu0 0.0
    %37 = vmatpush.msra.mxu0 0.0
    %38 = vmatpush.msra.mxu0 0.0
    %39 = vmatpush.msra.mxu0 0.0
    %40 = vmatpush.msra.mxu0 0.0
    %41 = vmatpush.msra.mxu0 0.0
    %42 = vmatpush.msra.mxu0 0.0
    %43 = vmatpush.msra.mxu0 0.0
    %44 = vmatpush.msra.mxu0 %v17
    %45 = vmatmul.f32.gmra.mxu0 %v24
    %v46 = vpop.f32.mrf.mxu0
    %v47 = vadd.f32 %v20, %v46
    %48 = vmatmul.f32.gmra.mxu0 %v27
    %v49 = vpop.f32.mrf.mxu0
    %v50 = vadd.f32 %v20, %v49
    %51 = vdwg.mxu0
    %v52 = vmax.f32 %v47, 0.0
    %v53 = vmax.f32 %v50, 0.0
    %54 = vst [vmem:[#allocation2] sm:$0xff] %v52
    %55 = vst [vmem:[#allocation2 + $0x8] sm:$0xff] %v53
    // Predicated region
    $region14: #{tpu_custom_call.1} parent=1 // pred_check
      _
    $region15: #{tpu_custom_call.1} parent=1 // pred_check_branch
      %57 = sbr.rel (0) target = $region17
    $region16: #{tpu_custom_call.1} parent=1 // pred_region
      %59 = vsyncadd [#allocation3], 0
      %s60 = sshll.u32 [#allocation2], 4
      %s61 = int_to_ptr.vmem [resolvable:$true] %s60
      %s62 = sshll.u32 %s3, 4
      %s63 = int_to_ptr.hbm [resolvable:$true] %s62
      %68 = dma.vmem_to_hbm [thread:$0]  %s61, 256, %s63, [#allocation3], 128, 128, 8
    $region17: #{tpu_custom_call.1} parent=1 // pred_fallthru
      _
    // Predicated region
    $region18: #{tpu_custom_call.1} parent=1 // pred_check
      _
    $region19: #{tpu_custom_call.1} parent=1 // pred_check_branch
      %70 = sbr.rel (0) target = $region21
    $region20: #{tpu_custom_call.1} parent=1 // pred_region
      %72 = dma.done [#allocation3], 256
    $region21: #{tpu_custom_call.1} parent=1 // pred_fallthru
      _
    %73 = vsyncpa [#allocation3], 1

</llo_original>
